<compile_context>
chip_gen: v7x
topology: tpu7x:2x2x1
jax: 0.10.0
libtpu: 0.0.40
codegen_flags: <defaults>
</compile_context>

<pallas_src>
import math

import jax
import jax.numpy as jnp
from jax.experimental import pallas as pl
from jax.experimental.pallas import tpu as pltpu


def _pos_emb_kernel(x_ref, w_ref, phase_ref, mask_ref, o_ref):
    # x_ref:     (TB, 1)        f32  positions
    # w_ref:     (1, dim + 1)   f32  [0 | 2*pi*w | 2*pi*w]
    # phase_ref: (1, dim + 1)   f32  [0 | 0..0   | pi/2..pi/2]
    # mask_ref:  (1, dim + 1)   f32  [1 | 0..0   | 0..0]
    # o_ref:     (TB, dim + 1)  f32  [x | sin(2*pi*x*w) | cos(2*pi*x*w)]
    x = x_ref[...]                                     # (TB, 1)
    theta = x * w_ref[...] + phase_ref[...]            # VPU broadcast FMA
    # Column 0 of sin(theta) is sin(0) == 0 exactly, so adding x*mask injects
    # the passthrough column; single unmasked whole-ref store.
    o_ref[...] = jnp.sin(theta) + x * mask_ref[...]


def _round_up(n, m):
    return ((n + m - 1) // m) * m


def _choose_row_tile(b, out_width, tb=None):
    """Row tile: ~2 MiB of output per block, multiple of 8, VMEM/megacore aware."""
    row_bytes = out_width * 4
    if tb is None:
        tb = (2 << 20) // row_bytes            # ~2 MiB of f32 output per block
    # Cap so the double-buffered footprint stays far inside v7x's 64 MiB VMEM
    # (v5e/v6e have 128 MiB; this cap is conservative everywhere).
    tb = min(tb, (8 << 20) // row_bytes)
    tb = max(tb, 8)
    tb = min(tb, _round_up(b, 8))
    tb = _round_up(tb, 8)                      # (8,128) sublane rule for the B axis
    if b > tb:
        return tb
    # Single-block grid: split in two for v7x megacore when B is big enough
    # that a second TensorCore actually helps.
    if b > 8 and b * row_bytes >= (1 << 20):
        tb = _round_up(-(-b // 2), 8)
    return tb


def random_or_learned_sinusoidal_pos_emb(x, weights, *, tb=None):
    """
    Args:
      x:       (B,) float32 positions (e.g. diffusion timesteps)
      weights: (half_dim,) float32 learned/random frequencies
    Returns:
      (B, 2*half_dim + 1) float32 laid out as [x | sin(2*pi*x*w) | cos(2*pi*x*w)],
      matching torch.cat((x, freqs.sin(), freqs.cos()), dim=-1).
    """
    assert x.ndim == 1
    assert weights.ndim == 1
    b = x.shape[0]
    half_dim = weights.shape[0]
    dim = 2 * half_dim
    out_width = dim + 1

    x2d = x.reshape(b, 1).astype(jnp.float32)

    # Tiny (1, dim+1) constant rows, built once in the wrapper.
    two_pi_w = weights.astype(jnp.float32) * (2.0 * math.pi)
    w_row = jnp.concatenate(
        [jnp.zeros((1,), jnp.float32), two_pi_w, two_pi_w]).reshape(1, out_width)
    phase_row = jnp.concatenate(
        [jnp.zeros((1 + half_dim,), jnp.float32),
         jnp.full((half_dim,), 0.5 * math.pi, jnp.float32)]).reshape(1, out_width)
    mask_row = jnp.zeros((1, out_width), jnp.float32).at[0, 0].set(1.0)

    # TODO(synk): for a handful of rows, or when a consumer can accept a
    # transposed (dim+1, B) layout for dim < 128, plain XLA fusion / a
    # lane-dense B-on-lanes layout beats any pallas_call; a production wrapper
    # would dispatch on (B, dim) here.
    tb = _choose_row_tile(b, out_width, tb)
    grid = (pl.cdiv(b, tb),)

    return pl.pallas_call(
        _pos_emb_kernel,
        out_shape=jax.ShapeDtypeStruct((b, out_width), jnp.float32),
        grid_spec=pltpu.PrefetchScalarGridSpec(
            num_scalar_prefetch=0,
            grid=grid,
            in_specs=[
                pl.BlockSpec((tb, 1), lambda i: (i, 0)),           # x rows, tiled
                pl.BlockSpec((1, out_width), lambda i: (0, 0)),    # freq row, resident
                pl.BlockSpec((1, out_width), lambda i: (0, 0)),    # phase row, resident
                pl.BlockSpec((1, out_width), lambda i: (0, 0)),    # mask row, resident
            ],
            out_specs=pl.BlockSpec((tb, out_width), lambda i: (i, 0)),
        ),
        compiler_params=pltpu.CompilerParams(
            dimension_semantics=("parallel",),     # megacore sharding on v7x
            vmem_limit_bytes=32 * 1024 * 1024,     # headroom for double-buffered tiles
        ),
    )(x2d, w_row, phase_row, mask_row)


def _reference(x, weights):
    x2 = x.reshape(-1, 1).astype(jnp.float32)
    w2 = weights.reshape(1, -1).astype(jnp.float32)
    freqs = x2 * w2 * 2.0 * math.pi
    return jnp.concatenate([x2, jnp.sin(freqs), jnp.cos(freqs)], axis=-1)


if __name__ == "__main__":
    key = jax.random.PRNGKey(0)
    k_x, k_w = jax.random.split(key)

    batch = 8
    dim = 16                      # must be even (matches nn.Module assert)
    half_dim = dim // 2

    # Deterministic "parameter" init, mirroring torch.randn(half_dim).
    weights = jax.random.normal(k_w, (half_dim,), dtype=jnp.float32)
    # Positions (e.g. diffusion timesteps scaled to [0, 1)).
    x = jax.random.uniform(k_x, (batch,), dtype=jnp.float32)

    out = jax.block_until_ready(random_or_learned_sinusoidal_pos_emb(x, weights))

    ref = _reference(x, weights)
    assert out.shape == (batch, dim + 1), out.shape
    assert out.dtype == jnp.float32
    assert jnp.allclose(out, ref, atol=1e-5, rtol=1e-5), float(
        jnp.max(jnp.abs(out - ref)))

    print("KERNEL_OK")
</pallas_src>

<mosaic_0001>
module attributes {stable_mosaic.version = 11 : i64} {
  func.func @_pos_emb_kernel(%arg0: i32, %arg1: memref<8x1xf32, #tpu.memory_space<vmem>>, %arg2: memref<1x17xf32, #tpu.memory_space<vmem>>, %arg3: memref<1x17xf32, #tpu.memory_space<vmem>>, %arg4: memref<1x17xf32, #tpu.memory_space<vmem>>, %arg5: memref<8x17xf32, #tpu.memory_space<vmem>>) attributes {dimension_semantics = [#tpu.dimension_semantics<parallel>], iteration_bounds = array<i64: 1>, scalar_prefetch = 0 : i64, scratch_operands = 0 : i64, tpu.core_type = #tpu.core_type<tc>, window_params = [{transform_indices = @transform_0, window_bounds = array<i64: 8, 1>}, {pipeline_mode = #tpu.pipeline_mode<synchronous>, transform_indices = @transform_1, window_bounds = array<i64: 1, 17>}, {pipeline_mode = #tpu.pipeline_mode<synchronous>, transform_indices = @transform_2, window_bounds = array<i64: 1, 17>}, {pipeline_mode = #tpu.pipeline_mode<synchronous>, transform_indices = @transform_3, window_bounds = array<i64: 1, 17>}, {transform_indices = @transform_4, window_bounds = array<i64: 8, 17>}]} {
    %c0 = arith.constant 0 : index
    %c0_0 = arith.constant 0 : index
    %0 = vector.load %arg1[%c0, %c0_0] : memref<8x1xf32, #tpu.memory_space<vmem>>, vector<8x1xf32>
    %c0_1 = arith.constant 0 : index
    %c0_2 = arith.constant 0 : index
    %1 = vector.load %arg2[%c0_1, %c0_2] : memref<1x17xf32, #tpu.memory_space<vmem>>, vector<1x17xf32>
    %2 = vector.broadcast %0 : vector<8x1xf32> to vector<8x17xf32>
    %3 = vector.broadcast %1 : vector<1x17xf32> to vector<8x17xf32>
    %4 = arith.mulf %2, %3 : vector<8x17xf32>
    %c0_3 = arith.constant 0 : index
    %c0_4 = arith.constant 0 : index
    %5 = vector.load %arg3[%c0_3, %c0_4] : memref<1x17xf32, #tpu.memory_space<vmem>>, vector<1x17xf32>
    %6 = vector.broadcast %5 : vector<1x17xf32> to vector<8x17xf32>
    %7 = arith.addf %4, %6 : vector<8x17xf32>
    %8 = math.sin %7 : vector<8x17xf32>
    %c0_5 = arith.constant 0 : index
    %c0_6 = arith.constant 0 : index
    %9 = vector.load %arg4[%c0_5, %c0_6] : memref<1x17xf32, #tpu.memory_space<vmem>>, vector<1x17xf32>
    %10 = vector.broadcast %0 : vector<8x1xf32> to vector<8x17xf32>
    %11 = vector.broadcast %9 : vector<1x17xf32> to vector<8x17xf32>
    %12 = arith.mulf %10, %11 : vector<8x17xf32>
    %13 = arith.addf %8, %12 : vector<8x17xf32>
    %c0_7 = arith.constant 0 : index
    %c0_8 = arith.constant 0 : index
    %14 = vector.load %arg5[%c0_7, %c0_8] : memref<8x17xf32, #tpu.memory_space<vmem>>, vector<8x17xf32>
    tpu.vector_store %arg5[%c0_7, %c0_8], %13 {strides = array<i32>} : memref<8x17xf32, #tpu.memory_space<vmem>>, vector<8x17xf32>,
    return
  }
  func.func @transform_0(%arg0: i32) -> (i32, i32) {
    %c0_i32 = arith.constant 0 : i32
    %c0_i32_0 = arith.constant 0 : i32
    return %arg0, %c0_i32 : i32, i32
  }
  func.func @transform_1(%arg0: i32) -> (i32, i32) {
    %c0_i32 = arith.constant 0 : i32
    %c0_i32_0 = arith.constant 0 : i32
    %c0_i32_1 = arith.constant 0 : i32
    return %c0_i32, %c0_i32_0 : i32, i32
  }
  func.func @transform_2(%arg0: i32) -> (i32, i32) {
    %c0_i32 = arith.constant 0 : i32
    %c0_i32_0 = arith.constant 0 : i32
    %c0_i32_1 = arith.constant 0 : i32
    return %c0_i32, %c0_i32_0 : i32, i32
  }
  func.func @transform_3(%arg0: i32) -> (i32, i32) {
    %c0_i32 = arith.constant 0 : i32
    %c0_i32_0 = arith.constant 0 : i32
    %c0_i32_1 = arith.constant 0 : i32
    return %c0_i32, %c0_i32_0 : i32, i32
  }
  func.func @transform_4(%arg0: i32) -> (i32, i32) {
    %c0_i32 = arith.constant 0 : i32
    %c0_i32_0 = arith.constant 0 : i32
    return %arg0, %c0_i32 : i32, i32
  }
}

</mosaic_0001>

<llo_original>
// kernel: tpu_custom_call.1
$region0: #{tpu_custom_call.1}
  #allocation0 [shape = 'u32[]', space=smem, size = 0x4, offset = 0x4, fixed_abs, tag = 'smem constant byte address 0x4 - core index']
  #allocation1 [shape = 'u32[144,128]{1,0:T(1,128)}', space=vmem, size = 0x12000, scoped, tag = 'internal scratch']
  %s0 = inlined_call_operand.vmem [shape: f32[8,1], index: 0, kind: input, shape index: {}]
  %s1 = inlined_call_operand.vmem [shape: f32[1,17], index: 1, kind: input, shape index: {}]
  %s2 = inlined_call_operand.vmem [shape: f32[1,17], index: 2, kind: input, shape index: {}]
  %s3 = inlined_call_operand.vmem [shape: f32[1,17], index: 3, kind: input, shape index: {}]
  %s4 = inlined_call_operand.hbm [shape: f32[8,17], index: 4, kind: output, shape index: {}]
  %s5 = sld [smem:[#allocation0]]
  $region26: #{tpu_custom_call.1} parent=0
    _
  %s7 = ssub.s32 1, %s5
  %s8 = scalar_select 0, %s7, %s5
  $region1: #{tpu_custom_call.1} parent=0
    #allocation2 [shape = 'u8[4096]{0}', space=vmem, size = 0x1000, scoped, tag = 'output window, operand 0, single buffered']
    #allocation3 [shape = 's32[1]{0}', space=sflag, size = 0x4, scoped, tag = 'scoped memory for tpu_custom_call.1']
    %9 = vsyncpa [#allocation3], 0
    // Predicated region
    $region2: #{tpu_custom_call.1} parent=1 // pred_check
      _
    $region3: #{tpu_custom_call.1} parent=1 // pred_check_branch
      %11 = sbr.rel (0) target = $region5
    $region4: #{tpu_custom_call.1} parent=1 // pred_region
      _
    $region5: #{tpu_custom_call.1} parent=1 // pred_fallthru
      _
    // Predicated region
    $region6: #{tpu_custom_call.1} parent=1 // pred_check
      _
    $region7: #{tpu_custom_call.1} parent=1 // pred_check_branch
      %13 = sbr.rel (0) target = $region9
    $region8: #{tpu_custom_call.1} parent=1 // pred_region
      _
    $region9: #{tpu_custom_call.1} parent=1 // pred_fallthru
      _
    // Predicated region
    $region10: #{tpu_custom_call.1} parent=1 // pred_check
      _
    $region11: #{tpu_custom_call.1} parent=1 // pred_check_branch
      %15 = sbr.rel (0) target = $region13
    $region12: #{tpu_custom_call.1} parent=1 // pred_region
      _
    $region13: #{tpu_custom_call.1} parent=1 // pred_fallthru
      _
    // Predicated region
    $region14: #{tpu_custom_call.1} parent=1 // pred_check
      _
    $region15: #{tpu_custom_call.1} parent=1 // pred_check_branch
      %17 = sbr.rel (0) target = $region17
    $region16: #{tpu_custom_call.1} parent=1 // pred_region
      _
    $region17: #{tpu_custom_call.1} parent=1 // pred_fallthru
      _
    %v18 = vld [vmem:[%s0] sm:$0xff]
    %v19 = vld [vmem:[%s1] sm:$0x1]
    %21 = vset.pattern.permute.xlu0 0
    %22 = vperm.xlu0 %21, %v18
    %v23 = vpop.permute.xlu0 %22
    %v26 = vlaneseq
    %v27 = vshrl.u32 %v26, 7
    %v28 = vsub.s32 0, %v27
    %v29 = vrot.slane %v19, %v28
    %v31 = vmul.f32 %v23, %v29
    %v32 = vld [vmem:[%s2] sm:$0x1]
    %v34 = vlaneseq
    %v35 = vshrl.u32 %v34, 7
    %v36 = vsub.s32 0, %v35
    %v37 = vrot.slane %v32, %v36
    %v39 = vadd.f32 %v31, %v37
    %v40 = vand.u32 2147483647, %v39
    %vm41 = vcmp.le.f32.partialorder %v40, 0.7853982
    %vm42 = vcmp.lt.s32.totalorder %v39, 0
    %v43 = vand.u32 %v39, 2139095040
    %v44 = vshrl.u32 %v43, 23
    %v45 = vsub.s32 %v44, 127
    %v46 = vand.u32 2147483647, %v39
    %v47 = vand.u32 %v46, 8388607
    %v48 = vor.u32 %v47, 8388608
    %v49 = vsub.s32 0, %v48
    %v50 = vadd.s32 %v45, 1
    %vm51 = vcmp.gt.s32.totalorder %v50, 0
    %v52 = vsel %vm51, %v50, 0
    %v53 = vshrl.u32 %v52, 5
    %v54 = vand.u32 %v52, 31
    %v55 = vsub.s32 32, %v54
    %v56 = vshrl.u32 683565275, %v55
    %v57 = vshll.u32 683565275, %v54
    %v58 = vshrl.u32 2475754826, %v55
    %v59 = vor.u32 %v57, %v58
    %v60 = vshll.u32 2475754826, %v54
    %v61 = vshrl.u32 2131351028, %v55
    %v62 = vor.u32 %v60, %v61
    %v63 = vshll.u32 2131351028, %v54
    %v64 = vshrl.u32 2102212464, %v55
    %v65 = vor.u32 %v63, %v64
    %v66 = vshll.u32 2102212464, %v54
    %v67 = vshrl.u32 920167782, %v55
    %v68 = vor.u32 %v66, %v67
    %v69 = vshll.u32 920167782, %v54
    %v70 = vshrl.u32 1326507024, %v55
    %v71 = vor.u32 %v69, %v70
    %vm72 = vcmp.lt.s32.totalorder %v53, 1
    %vm73 = vcmp.lt.s32.totalorder %v53, 2
    %vm74 = vcmp.lt.s32.totalorder %v53, 3
    %vm75 = vcmp.lt.s32.totalorder %v53, 4
    %v76 = vsel %vm72, %v56, %v59
    %v77 = vsel %vm75, %v65, 2102212464
    %v78 = vsel %vm74, %v62, %v77
    %v79 = vsel %vm73, %v76, %v78
    %v80 = vsel %vm72, %v59, %v62
    %v81 = vsel %vm75, %v68, 920167782
    %v82 = vsel %vm74, %v65, %v81
    %v83 = vsel %vm73, %v80, %v82
    %v84 = vsel %vm72, %v62, %v65
    %v85 = vsel %vm75, %v71, 1326507024
    %v86 = vsel %vm74, %v68, %v85
    %v87 = vsel %vm73, %v84, %v86
    %v88 = vshll.u32 %v48, 8
    %v89 = vmul.u32.u64.compose %v88, %v87
    %v90 = vextract.low.u32 %v89
    %v91 = vextract.high.u32 %v89
    %v92 = vmul.u32.u64.compose %v88, %v83
    %v93 = vextract.low.u32 %v92
    %v94 = vextract.high.u32 %v92
    %v95 = vmul.u32 %v88, %v79
    %v96 = vadd.s32 %v91, %v93
    %vm97 = vc.u32 %v91, %v93
    %v98 = vadd.s32 %v94, 1
    %v99 = vsel %vm97, %v98, %v94
    %v100 = vadd.s32 %v95, %v99
    %v101 = vadd.s32 %v100, 536870912
    %v102 = vshrl.u32 %v101, 30
    %v103 = vshll.u32 %v102, 30
    %v104 = vsub.s32 %v100, %v103
    %vm105 = vcmp.lt.s32.totalorder %v104, 0
    %v106 = vsub.s32 0, %v104
    %v107 = vsel %vm105, %v106, %v104
    %v108 = vclz %v107
    %v109 = vsub.s32 %v108, 2
    %vm110 = vcmp.gt.s32.totalorder 0, %v109
    %v111 = vsel %vm110, 0, %v109
    %v112 = vsub.s32 32, %v111
    %v113 = vshll.u32 %v104, %v111
    %v114 = vshrl.u32 %v96, %v112
    %v115 = vor.u32 %v113, %v114
    %v116 = vsub.s32 4294967266, %v111
    %v117 = vadd.s32 %v116, 127
    %v118 = vshll.u32 %v117, 23
    %v119 = vor.u32 4788187, %v118
    %v120 = vand.u32 2147483647, %v119
    %v122 = vcvt.s32.f32 %v115
    %v123 = vmul.f32 %v122, %v120
    %v124 = vxor.u32 %v123, 2147483648
    %v125 = vsel %vm42, %v124, %v123
    %v126 = vsub.s32 4, %v102
    %v127 = vsel %vm42, %v126, %v102
    %v128 = vsel %vm41, %v39, %v125
    %v129 = vsel %vm41, 0, %v127
    %v130 = vcosq.f32.pop %v128
    %v131 = vsinq.f32.pop %v128
    %vm132 = vweird.f32 %v39
    %v133 = vadd.s32 %v129, 3
    %v134 = vand.u32 %v133, 3
    %vm135 = vcmp.lt.s32.totalorder %v134, 2
    %vm136 = vcmp.eq.s32.totalorder %v134, 0
    %v137 = vxor.u32 %v131, 2147483648
    %v138 = vsel %vm136, %v130, %v137
    %vm139 = vcmp.eq.s32.totalorder %v134, 2
    %v140 = vxor.u32 %v130, 2147483648
    %v141 = vsel %vm139, %v140, %v131
    %v142 = vsel %vm135, %v138, %v141
    %v143 = vsel %vm132, nan, %v142
    %v144 = vld [vmem:[%s3] sm:$0x1]
    %v146 = vlaneseq
    %v147 = vshrl.u32 %v146, 7
    %v148 = vsub.s32 0, %v147
    %v149 = vrot.slane %v144, %v148
    %v151 = vmul.f32 %v23, %v149
    %v152 = vadd.f32 %v143, %v151
    %vm153 = vcmask 138240
    %154 = vst.msk [vmem:[#allocation2] sm:$0xff] %vm153, %v152
    // Predicated region
    $region18: #{tpu_custom_call.1} parent=1 // pred_check
      _
    $region19: #{tpu_custom_call.1} parent=1 // pred_check_branch
      %156 = sbr.rel (0) target = $region21
    $region20: #{tpu_custom_call.1} parent=1 // pred_region
      %s158 = ssub.s32 128, 128
      %159 = vsyncadd [#allocation3], %s158
      %s161 = sshll.u32 [#allocation2], 4
      %s162 = int_to_ptr.vmem [resolvable:$true] %s161
      %164 = dma.vmem_to_hbm [thread:$0]  %s162, 128, %s4, [#allocation3]
    $region21: #{tpu_custom_call.1} parent=1 // pred_fallthru
      _
    // Predicated region
    $region22: #{tpu_custom_call.1} parent=1 // pred_check
      _
    $region23: #{tpu_custom_call.1} parent=1 // pred_check_branch
      %166 = sbr.rel (0) target = $region25
    $region24: #{tpu_custom_call.1} parent=1 // pred_region
      %167 = dma.done [#allocation3], 128
    $region25: #{tpu_custom_call.1} parent=1 // pred_fallthru
      _
    %168 = vsyncpa [#allocation3], 1

</llo_original>
